<compile_context>
chip_gen: v7x
topology: tpu7x:2x2x1
jax: 0.10.0
libtpu: 0.0.40
codegen_flags: <defaults>
</compile_context>

<pallas_src>
import functools

import jax
import jax.numpy as jnp
from jax import lax
from jax.experimental import pallas as pl
from jax.experimental.pallas import tpu as pltpu

EPS = 1e-10
_LANE = 128
_MiB = 1024 * 1024


def _round_up(a, m):
    return (a + m - 1) // m * m


def _round_down(a, m):
    return max(m, (a // m) * m)


def _vmem_budgets():
    """Returns (per-block byte budget, vmem_limit cap) for this TPU generation."""
    try:
        phys = int(pltpu.get_tpu_info().vmem_capacity_bytes)
    except Exception:
        phys = 64 * _MiB  # be conservative (v7x-like) if the query is unavailable
    if phys >= 128 * _MiB:
        # v5e / v6e: 128 MiB physical VMEM -> big blocks, 64 MiB scoped limit.
        return 8 * _MiB, 64 * _MiB
    # v7x: 64 MiB physical / 32 MiB scoped default -> keep live I/O <= ~28 MiB.
    return 4 * _MiB, 32 * _MiB


# ---------------------------------------------------------------------------
# Kernels
# ---------------------------------------------------------------------------
def _l2norm_kernel(x_ref, o_ref):
    # Single-pass path: whole D is resident.  f32 accumulation, rsqrt on the
    # EUP, broadcast multiply on the VPU.  Masked row-tail blocks only ever
    # mix data within a row, so stale padding rows never contaminate valid
    # rows (their stores are dropped).
    x32 = x_ref[...].astype(jnp.float32)
    ss = jnp.sum(x32 * x32, axis=-1, keepdims=True)
    inv = lax.rsqrt(ss + EPS)
    o_ref[...] = (x32 * inv).astype(o_ref.dtype)


def _inv_norm_kernel(x_ref, inv_ref, *, valid_d):
    # Wide-D pass 1: accumulate sum of squares across the D grid axis into the
    # resident (row_tile, 1) f32 output block; finalize with rsqrt last step.
    k = pl.program_id(1)

    @pl.when(k == 0)
    def _():
        inv_ref[...] = jnp.zeros_like(inv_ref)

    x32 = x_ref[...].astype(jnp.float32)
    # The last D block may contain stale VMEM columns: mask them to zero so
    # they contribute nothing to the reduction.
    d_tile = x_ref.shape[-1]
    col = lax.broadcasted_iota(jnp.int32, x32.shape, 1) + k * d_tile
    x32 = jnp.where(col < valid_d, x32, 0.0)
    inv_ref[...] += jnp.sum(x32 * x32, axis=-1, keepdims=True)

    @pl.when(k == pl.num_programs(1) - 1)
    def _():
        inv_ref[...] = lax.rsqrt(inv_ref[...] + EPS)


def _scale_kernel(x_ref, inv_ref, o_ref):
    # Wide-D pass 2: broadcast the precomputed 1/norm over each D tile.
    # Stale tail columns produce garbage values but their stores are masked.
    o_ref[...] = (x_ref[...].astype(jnp.float32) * inv_ref[...]).astype(o_ref.dtype)


# ---------------------------------------------------------------------------
# Wrappers
# ---------------------------------------------------------------------------
def _l2norm_wide(x, *, row_tile, d_tile, block_budget, vmem_cap, row_mult):
    """Two-pass path for very wide D (or when forced for testing)."""
    N, D = x.shape
    dtype = x.dtype
    itemsize = jnp.dtype(dtype).itemsize

    if d_tile is None:
        d_tile = _round_down(block_budget // (row_mult * itemsize), _LANE)
    d_tile = max(_LANE, _round_down(int(d_tile), _LANE))
    d_tile = min(d_tile, _round_up(D, _LANE))

    if row_tile is None:
        row_tile = _round_down(block_budget // (d_tile * itemsize), row_mult)
    else:
        row_tile = max(row_mult, _round_down(int(row_tile), row_mult))
    if row_tile >= N:
        row_tile = N  # full-extent rows: always layout-legal

    n_i = pl.cdiv(N, row_tile)
    n_k = pl.cdiv(D, d_tile)
    block_bytes = row_tile * d_tile * itemsize
    vmem_limit = int(min(max(6 * block_bytes, 16 * _MiB), vmem_cap))

    inv = pl.pallas_call(
        functools.partial(_inv_norm_kernel, valid_d=D),
        out_shape=jax.ShapeDtypeStruct((N, 1), jnp.float32),
        grid=(n_i, n_k),
        in_specs=[pl.BlockSpec((row_tile, d_tile), lambda i, k: (i, k))],
        out_specs=pl.BlockSpec((row_tile, 1), lambda i, k: (i, 0)),
        compiler_params=pltpu.CompilerParams(
            dimension_semantics=("parallel", "arbitrary"),
            vmem_limit_bytes=vmem_limit,
        ),
        cost_estimate=pl.CostEstimate(
            flops=2 * N * D, transcendentals=N, bytes_accessed=N * D * itemsize),
    )(x)

    out = pl.pallas_call(
        _scale_kernel,
        out_shape=jax.ShapeDtypeStruct((N, D), dtype),
        grid=(n_i, n_k),
        in_specs=[pl.BlockSpec((row_tile, d_tile), lambda i, k: (i, k)),
                  pl.BlockSpec((row_tile, 1), lambda i, k: (i, 0))],
        out_specs=pl.BlockSpec((row_tile, d_tile), lambda i, k: (i, k)),
        compiler_params=pltpu.CompilerParams(
            dimension_semantics=("parallel", "parallel"),
            vmem_limit_bytes=vmem_limit,
        ),
        cost_estimate=pl.CostEstimate(
            flops=N * D, transcendentals=0,
            bytes_accessed=2 * N * D * itemsize),
    )(x, inv)
    return out


def l2norm(x, *, row_tile=None, d_tile=None, force_wide_d=False):
    """Row-wise L2 normalization of a 2-D array: x / sqrt(sum(x*x, -1) + eps)."""
    N, D = x.shape
    dtype = x.dtype
    itemsize = jnp.dtype(dtype).itemsize
    # Sublane packing: 8 rows/vreg for f32, 16 for bf16, 32 for int8/fp8.
    row_mult = max(8, 32 // itemsize)
    block_budget, vmem_cap = _vmem_budgets()

    # Lane-dense last dim: pad D to a multiple of 128 (zeros add nothing to
    # the sum of squares) so stores are unmasked full-vreg vst.
    Dp = _round_up(D, _LANE)

    # Wide-D: even a minimum-height block would blow the per-chip budget.
    if force_wide_d or (row_mult * Dp * itemsize > block_budget):
        return _l2norm_wide(x, row_tile=row_tile, d_tile=d_tile,
                            block_budget=block_budget, vmem_cap=vmem_cap,
                            row_mult=row_mult)

    xp = jnp.pad(x, ((0, 0), (0, Dp - D))) if Dp != D else x
    row_bytes = Dp * itemsize

    # Biggest row tile that keeps one block inside the per-chip byte budget
    # (also guards caller-supplied row_tile against VMEM over-provisioning).
    max_rows = _round_down(block_budget // row_bytes, row_mult)
    if row_tile is None:
        row_tile = max_rows
    else:
        row_tile = min(max(int(row_tile), 1), max_rows)
        if row_tile < N:
            row_tile = _round_down(row_tile, row_mult)

    if row_tile >= N:
        # Whole array fits one block.  A single grid step leaves one of v7x's
        # two TensorCores idle, so split big-enough inputs ~4 ways.
        if N * row_bytes > 2 * _MiB and N >= 4 * row_mult:
            row_tile = _round_up(-(-N // 4), row_mult)
        else:
            row_tile = N  # single full-extent block (always layout-legal)

    grid = (pl.cdiv(N, row_tile),)
    block_bytes = row_tile * row_bytes
    # 2 in + 2 out double-buffered blocks + headroom, capped per generation.
    vmem_limit = int(min(max(6 * block_bytes, 16 * _MiB), vmem_cap))

    out = pl.pallas_call(
        _l2norm_kernel,
        out_shape=jax.ShapeDtypeStruct((N, Dp), dtype),
        grid=grid,
        in_specs=[pl.BlockSpec((row_tile, Dp), lambda i: (i, 0))],
        out_specs=pl.BlockSpec((row_tile, Dp), lambda i: (i, 0)),
        compiler_params=pltpu.CompilerParams(
            dimension_semantics=("parallel",),
            vmem_limit_bytes=vmem_limit,
        ),
        cost_estimate=pl.CostEstimate(
            flops=3 * N * D, transcendentals=N,
            bytes_accessed=2 * N * D * itemsize),
    )(xp)
    return out[:, :D] if Dp != D else out


if __name__ == "__main__":
    key = jax.random.PRNGKey(0)
    k1, k2, k3, k4, k5 = jax.random.split(key, 5)

    def ref_l2norm(x):
        x32 = x.astype(jnp.float32)
        n = jnp.sqrt(jnp.sum(x32 * x32, axis=1, keepdims=True) + EPS)
        return (x32 / n).astype(x.dtype)

    # 1) Small HardNet-style descriptor batch: single full-extent block.
    x1 = jax.random.normal(k1, (16, 128), dtype=jnp.float32)
    o1 = jax.block_until_ready(l2norm(x1))
    assert o1.shape == x1.shape and o1.dtype == x1.dtype
    assert jnp.allclose(o1, ref_l2norm(x1), atol=1e-5, rtol=1e-5)

    # 2) Non-dividing N with an explicit tile: cdiv grid + masked row tail.
    x2 = jax.random.normal(k2, (300, 128), dtype=jnp.float32)
    o2 = jax.block_until_ready(l2norm(x2, row_tile=128))
    assert o2.shape == x2.shape
    assert jnp.allclose(o2, ref_l2norm(x2), atol=1e-5, rtol=1e-5)

    # 3) bf16 input: f32 accumulation inside the kernel keeps eps meaningful.
    x3 = jax.random.normal(k3, (64, 128), dtype=jnp.bfloat16)
    o3 = jax.block_until_ready(l2norm(x3))
    assert o3.dtype == jnp.bfloat16
    assert jnp.allclose(o3.astype(jnp.float32),
                        ref_l2norm(x3).astype(jnp.float32),
                        atol=2e-2, rtol=2e-2)

    # 4) Non-128-multiple D: wrapper pads to a lane-dense width and slices back.
    x4 = jax.random.normal(k4, (40, 96), dtype=jnp.float32)
    o4 = jax.block_until_ready(l2norm(x4))
    assert o4.shape == x4.shape
    assert jnp.allclose(o4, ref_l2norm(x4), atol=1e-5, rtol=1e-5)

    # 5) Wide-D two-pass path, forced at a small shape for a quick check.
    x5 = jax.random.normal(k5, (24, 384), dtype=jnp.float32)
    o5 = jax.block_until_ready(l2norm(x5, force_wide_d=True,
                                      d_tile=128, row_tile=8))
    assert o5.shape == x5.shape
    assert jnp.allclose(o5, ref_l2norm(x5), atol=1e-5, rtol=1e-5)

    print("KERNEL_OK")
</pallas_src>

<mosaic_0001>
module attributes {stable_mosaic.version = 11 : i64} {
  func.func @_l2norm_kernel(%arg0: i32, %arg1: memref<16x128xf32, #tpu.memory_space<vmem>>, %arg2: memref<16x128xf32, #tpu.memory_space<vmem>>) attributes {dimension_semantics = [#tpu.dimension_semantics<parallel>], iteration_bounds = array<i64: 1>, scalar_prefetch = 0 : i64, scratch_operands = 0 : i64, tpu.core_type = #tpu.core_type<tc>, window_params = [{transform_indices = @transform_0, window_bounds = array<i64: 16, 128>}, {transform_indices = @transform_1, window_bounds = array<i64: 16, 128>}]} {
    %c0 = arith.constant 0 : index
    %c0_0 = arith.constant 0 : index
    %0 = vector.load %arg1[%c0, %c0_0] : memref<16x128xf32, #tpu.memory_space<vmem>>, vector<16x128xf32>
    %1 = arith.mulf %0, %0 : vector<16x128xf32>
    %cst = arith.constant dense<0.000000e+00> : vector<16xf32>
    %2 = vector.multi_reduction <add>, %1, %cst [1] : vector<16x128xf32> to vector<16xf32>
    %3 = vector.shape_cast %2 : vector<16xf32> to vector<16x1xf32>
    %cst_1 = arith.constant 1.000000e-10 : f32
    %4 = vector.broadcast %cst_1 : f32 to vector<16x1xf32>
    %5 = arith.addf %3, %4 : vector<16x1xf32>
    %6 = math.rsqrt %5 : vector<16x1xf32>
    %7 = vector.broadcast %6 : vector<16x1xf32> to vector<16x128xf32>
    %8 = arith.mulf %0, %7 : vector<16x128xf32>
    %c0_2 = arith.constant 0 : index
    %c0_3 = arith.constant 0 : index
    %9 = vector.load %arg2[%c0_2, %c0_3] : memref<16x128xf32, #tpu.memory_space<vmem>>, vector<16x128xf32>
    tpu.vector_store %arg2[%c0_2, %c0_3], %8 {strides = array<i32>} : memref<16x128xf32, #tpu.memory_space<vmem>>, vector<16x128xf32>,
    return
  }
  func.func @transform_0(%arg0: i32) -> (i32, i32) {
    %c0_i32 = arith.constant 0 : i32
    %c0_i32_0 = arith.constant 0 : i32
    return %arg0, %c0_i32 : i32, i32
  }
  func.func @transform_1(%arg0: i32) -> (i32, i32) {
    %c0_i32 = arith.constant 0 : i32
    %c0_i32_0 = arith.constant 0 : i32
    return %arg0, %c0_i32 : i32, i32
  }
}

</mosaic_0001>

<llo_original>
// kernel: tpu_custom_call.1
$region0: #{tpu_custom_call.1}
  #allocation0 [shape = 'u32[]', space=smem, size = 0x4, offset = 0x4, fixed_abs, tag = 'smem constant byte address 0x4 - core index']
  #allocation1 [shape = 'u32[144,128]{1,0:T(1,128)}', space=vmem, size = 0x12000, scoped, tag = 'internal scratch']
  %s0 = inlined_call_operand.hbm [shape: f32[16,128], index: 0, kind: input, shape index: {}]
  %s1 = inlined_call_operand.hbm [shape: f32[16,128], index: 1, kind: output, shape index: {}]
  %s2 = sld [smem:[#allocation0]]
  $region18: #{tpu_custom_call.1} parent=0
    _
  %s4 = ssub.s32 1, %s2
  %s5 = scalar_select 0, %s4, %s2
  $region1: #{tpu_custom_call.1} parent=0
    #allocation2 [shape = 'u8[8192]{0}', space=vmem, size = 0x2000, scoped, tag = 'input window, operand 0, single buffered']
    #allocation3 [shape = 's32[1]{0}', space=sflag, size = 0x4, scoped, tag = 'scoped memory for tpu_custom_call.1']
    #allocation4 [shape = 's32[1]{0}', space=sflag, size = 0x4, scoped, tag = 'scoped memory for tpu_custom_call.1']
    #allocation5 [shape = 'u8[8192]{0}', space=vmem, size = 0x2000, scoped, tag = 'output window, operand 0, single buffered']
    %6 = vsyncpa [#allocation3], 0
    %7 = vsyncpa [#allocation4], 0
    // Predicated region
    $region2: #{tpu_custom_call.1} parent=1 // pred_check
      _
    $region3: #{tpu_custom_call.1} parent=1 // pred_check_branch
      %9 = sbr.rel (0) target = $region5
    $region4: #{tpu_custom_call.1} parent=1 // pred_region
      %s11 = ssub.s32 256, 256
      %12 = vsyncadd [#allocation3], %s11
      %s13 = sshll.u32 [#allocation2], 4
      %s14 = int_to_ptr.vmem [resolvable:$true] %s13
      %19 = dma.hbm_to_vmem [thread:$0]  %s0, 256, %s14, [#allocation3], 128, 128, 8
    $region5: #{tpu_custom_call.1} parent=1 // pred_fallthru
      _
    // Predicated region
    $region6: #{tpu_custom_call.1} parent=1 // pred_check
      _
    $region7: #{tpu_custom_call.1} parent=1 // pred_check_branch
      %21 = sbr.rel (0) target = $region9
    $region8: #{tpu_custom_call.1} parent=1 // pred_region
      %22 = dma.done [#allocation3], 256
    $region9: #{tpu_custom_call.1} parent=1 // pred_fallthru
      _
    %v23 = vld [vmem:[#allocation2] sm:$0xff]
    %v24 = vld [vmem:[#allocation2 + $0x8] sm:$0xff]
    %v25 = vmul.f32 %v23, %v23
    %v26 = vmul.f32 %v24, %v24
    %27 = vadd.xlane.f32.xlu0 %v25
    %v28 = vpop.xlane.xlu0 %27
    %29 = vadd.xlane.f32.xlu0 %v26
    %v30 = vpop.xlane.xlu0 %29
    %v31 = vadd.f32 %v28, 1e-10
    %v32 = vadd.f32 %v30, 1e-10
    %v33 = vrsqrt.pop %v31
    %v34 = vrsqrt.pop %v32
    %v35 = vmul.f32 %v23, %v33
    %v36 = vmul.f32 %v24, %v34
    %37 = vst [vmem:[#allocation5] sm:$0xff] %v35
    %38 = vst [vmem:[#allocation5 + $0x8] sm:$0xff] %v36
    // Predicated region
    $region10: #{tpu_custom_call.1} parent=1 // pred_check
      _
    $region11: #{tpu_custom_call.1} parent=1 // pred_check_branch
      %40 = sbr.rel (0) target = $region13
    $region12: #{tpu_custom_call.1} parent=1 // pred_region
      %s42 = ssub.s32 256, 256
      %43 = vsyncadd [#allocation4], %s42
      %s44 = sshll.u32 [#allocation5], 4
      %s45 = int_to_ptr.vmem [resolvable:$true] %s44
      %50 = dma.vmem_to_hbm [thread:$0]  %s45, 256, %s1, [#allocation4], 128, 128, 8
    $region13: #{tpu_custom_call.1} parent=1 // pred_fallthru
      _
    // Predicated region
    $region14: #{tpu_custom_call.1} parent=1 // pred_check
      _
    $region15: #{tpu_custom_call.1} parent=1 // pred_check_branch
      %52 = sbr.rel (0) target = $region17
    $region16: #{tpu_custom_call.1} parent=1 // pred_region
      %53 = dma.done [#allocation4], 256
    $region17: #{tpu_custom_call.1} parent=1 // pred_fallthru
      _
    %54 = vsyncpa [#allocation3], 1
    %55 = vsyncpa [#allocation4], 1

</llo_original>
